<compile_context>
chip_gen: v5e
topology: v5e:2x2
jax: 0.10.0
libtpu: 0.0.40
codegen_flags: <defaults>
</compile_context>

<pallas_src>
import jax
import jax.numpy as jnp
from jax.experimental import pallas as pl
from jax.experimental.pallas import tpu as pltpu


_STEP_BUDGET_BYTES = 6 << 20   # ~6 MiB of x+out per grid step: past the 2-4 MiB knee
                               # measured on v6e, toward the 4-8 MiB v7x wants.
_MAX_BATCH_BLOCK = 32          # bound the in-kernel static unroll / compile time.


def _round_down_multiple(x, m):
    return (x // m) * m


def _round_up_multiple(x, m):
    return -(-x // m) * m


def _choose_blocks(N, C_in, C_out, HW, itemsize, budget):
    """Pick (bn, tile_hw) so one grid step moves ~budget bytes of x+out."""
    per_col = (C_in + C_out) * itemsize     # x+out bytes per spatial column per image

    if HW > 128 and HW * per_col >= budget:
        # Large feature map: tile spatially (multiple of 128 lanes), one image/step.
        tile_hw = max(128, _round_down_multiple(budget // per_col, 128))
        bn = 1
    else:
        # Small feature map: take the full spatial extent (block dim == array dim is
        # always legal) and fold several images per step to amortize grid overhead.
        tile_hw = HW
        bn = int(min(N, _MAX_BATCH_BLOCK, max(1, budget // max(1, HW * per_col))))

    n_b = pl.cdiv(N, bn)
    n_hw = pl.cdiv(HW, tile_hw)

    # v7x has 2 TensorCores sharing the grid: avoid a degenerate 1-step grid when each
    # half would still move >= ~1 MiB.  (Harmless on single-TC v5e/v6e.)
    if n_b * n_hw == 1 and bn * HW * per_col >= (2 << 20):
        if bn > 1:
            bn = (bn + 1) // 2
        elif tile_hw > 128:
            tile_hw = max(128, _round_up_multiple((tile_hw + 1) // 2, 128))
        n_b = pl.cdiv(N, bn)
        n_hw = pl.cdiv(HW, tile_hw)

    return bn, tile_hw, n_b, n_hw


def _outconv_kernel(x_ref, w_ref, b_ref, o_ref):
    # x_ref: (bn, C_in, T)  channels on sublanes, spatial on lanes (lane-dense)
    # w_ref: (C_out, C_in)  VMEM-resident across all grid steps
    # b_ref: (C_out, 1)
    # o_ref: (bn, C_out, T) lane-dense, full-width stores
    w = w_ref[...]
    b = b_ref[...]
    for i in range(x_ref.shape[0]):          # static unroll over the batch block
        acc = jnp.dot(w, x_ref[i], preferred_element_type=jnp.float32)
        o_ref[i] = (acc + b).astype(o_ref.dtype)


def outconv_forward(x_nchw, weight, bias, *, step_budget_bytes=_STEP_BUDGET_BYTES):
    """Forward of nn.Conv2d(in_ch, out_ch, kernel_size=1).

    x_nchw: (N, C_in, H, W)
    weight: (C_out, C_in, 1, 1)   -- PyTorch Conv2d weight layout
    bias:   (C_out,)
    returns (N, C_out, H, W)
    """
    N, C_in, H, W = x_nchw.shape
    C_out = weight.shape[0]
    HW = H * W
    itemsize = x_nchw.dtype.itemsize

    # Free reshapes (row-major contiguous) -- no transposes, no extra HBM pass.
    x3 = x_nchw.reshape(N, C_in, HW)
    w_mat = weight.reshape(C_out, C_in).astype(x_nchw.dtype)
    b_col = bias.reshape(C_out, 1)

    bn, tile_hw, n_b, n_hw = _choose_blocks(N, C_in, C_out, HW, itemsize,
                                            step_budget_bytes)

    # 3-deep input pipelining only pays off when there are enough grid steps.
    use_deep_pipeline = (n_b * n_hw) >= 3
    x_index = lambda b, j: (b, 0, j)
    x_block = (bn, C_in, tile_hw)
    if use_deep_pipeline:
        try:
            x_spec = pl.BlockSpec(x_block, x_index, pipeline_mode=pl.Buffered(3))
        except TypeError:  # older Pallas without pipeline_mode: fall back to default 2
            x_spec = pl.BlockSpec(x_block, x_index)
            use_deep_pipeline = False
    else:
        x_spec = pl.BlockSpec(x_block, x_index)

    # Explicit scoped-VMEM budget: block buffers + resident weights, with headroom.
    x_block_bytes = bn * C_in * tile_hw * itemsize
    o_block_bytes = bn * C_out * tile_hw * itemsize
    w_bytes = C_out * C_in * itemsize + C_out * itemsize
    x_bufs = 3 if use_deep_pipeline else 2
    needed = x_bufs * x_block_bytes + 2 * o_block_bytes + w_bytes
    vmem_limit = int(min(max(2 * needed, 32 << 20), 48 << 20))

    flops = 2 * N * HW * C_in * C_out
    bytes_accessed = (x3.size * x3.dtype.itemsize
                      + w_mat.size * w_mat.dtype.itemsize
                      + b_col.size * b_col.dtype.itemsize
                      + N * C_out * HW * itemsize)

    out3 = pl.pallas_call(
        _outconv_kernel,
        out_shape=jax.ShapeDtypeStruct((N, C_out, HW), x_nchw.dtype),
        grid_spec=pltpu.PrefetchScalarGridSpec(
            num_scalar_prefetch=0,
            grid=(n_b, n_hw),
            in_specs=[
                x_spec,
                pl.BlockSpec((C_out, C_in), lambda b, j: (0, 0)),
                pl.BlockSpec((C_out, 1), lambda b, j: (0, 0)),
            ],
            out_specs=pl.BlockSpec((bn, C_out, tile_hw), lambda b, j: (b, 0, j)),
        ),
        compiler_params=pltpu.CompilerParams(
            dimension_semantics=("parallel", "parallel"),
            vmem_limit_bytes=vmem_limit),
        cost_estimate=pl.CostEstimate(
            flops=flops, transcendentals=0, bytes_accessed=bytes_accessed),
    )(x3, w_mat, b_col)

    return out3.reshape(N, C_out, H, W)


def init_outconv_params(key, in_ch, out_ch):
    """Deterministic init mimicking PyTorch Conv2d defaults (uniform +/- 1/sqrt(fan_in))."""
    kw, kb = jax.random.split(key)
    fan_in = in_ch * 1 * 1
    bound = 1.0 / (fan_in ** 0.5)
    weight = jax.random.uniform(kw, (out_ch, in_ch, 1, 1),
                                minval=-bound, maxval=bound, dtype=jnp.float32)
    bias = jax.random.uniform(kb, (out_ch,),
                              minval=-bound, maxval=bound, dtype=jnp.float32)
    return weight, bias


def _reference(x, weight, bias):
    C_out, C_in = weight.shape[0], weight.shape[1]
    return (jnp.einsum("nchw,oc->nohw", x, weight.reshape(C_out, C_in))
            + bias.reshape(1, C_out, 1, 1))


if __name__ == "__main__":
    key = jax.random.PRNGKey(0)
    k_x, k_p, k_x2 = jax.random.split(key, 3)

    # --- main test: small shapes, whole-extent block + batch folding path ---
    N, C_in, H, W = 2, 4, 16, 16
    C_out = 8
    x = jax.random.normal(k_x, (N, C_in, H, W), dtype=jnp.float32)
    weight, bias = init_outconv_params(k_p, C_in, C_out)

    out = jax.block_until_ready(outconv_forward(x, weight, bias))
    ref = _reference(x, weight, bias)
    assert out.shape == (N, C_out, H, W)
    assert jnp.allclose(out, ref, atol=1e-5, rtol=1e-5)

    # --- second test: tiny budget forces spatial tiling, partial tail block and the
    #     3-deep pipeline path (same code paths big images hit at the real budget) ---
    N2, H2, W2 = 3, 20, 20
    x2 = jax.random.normal(k_x2, (N2, C_in, H2, W2), dtype=jnp.float32)
    out2 = jax.block_until_ready(
        outconv_forward(x2, weight, bias, step_budget_bytes=16 * 1024))
    ref2 = _reference(x2, weight, bias)
    assert out2.shape == (N2, C_out, H2, W2)
    assert jnp.allclose(out2, ref2, atol=1e-5, rtol=1e-5)

    print("KERNEL_OK")
</pallas_src>

<mosaic_0001>
module attributes {stable_mosaic.version = 11 : i64} {
  func.func @_outconv_kernel(%arg0: i32, %arg1: i32, %arg2: memref<2x4x256xf32, #tpu.memory_space<vmem>>, %arg3: memref<8x4xf32, #tpu.memory_space<vmem>>, %arg4: memref<8x1xf32, #tpu.memory_space<vmem>>, %arg5: memref<2x8x256xf32, #tpu.memory_space<vmem>>) attributes {dimension_semantics = [#tpu.dimension_semantics<parallel>, #tpu.dimension_semantics<parallel>], iteration_bounds = array<i64: 1, 1>, scalar_prefetch = 0 : i64, scratch_operands = 0 : i64, tpu.core_type = #tpu.core_type<tc>, window_params = [{transform_indices = @transform_0, window_bounds = array<i64: 2, 4, 256>}, {pipeline_mode = #tpu.pipeline_mode<synchronous>, transform_indices = @transform_1, window_bounds = array<i64: 8, 4>}, {pipeline_mode = #tpu.pipeline_mode<synchronous>, transform_indices = @transform_2, window_bounds = array<i64: 8, 1>}, {transform_indices = @transform_3, window_bounds = array<i64: 2, 8, 256>}]} {
    %c0 = arith.constant 0 : index
    %c0_0 = arith.constant 0 : index
    %0 = vector.load %arg3[%c0, %c0_0] : memref<8x4xf32, #tpu.memory_space<vmem>>, vector<8x4xf32>
    %c0_1 = arith.constant 0 : index
    %c0_2 = arith.constant 0 : index
    %1 = vector.load %arg4[%c0_1, %c0_2] : memref<8x1xf32, #tpu.memory_space<vmem>>, vector<8x1xf32>
    %c0_3 = arith.constant 0 : index
    %c0_4 = arith.constant 0 : index
    %c0_5 = arith.constant 0 : index
    %2 = vector.load %arg2[%c0_3, %c0_4, %c0_5] : memref<2x4x256xf32, #tpu.memory_space<vmem>>, vector<1x4x256xf32>
    %3 = vector.shape_cast %2 : vector<1x4x256xf32> to vector<4x256xf32>
    %cst = arith.constant dense<0.000000e+00> : vector<8x256xf32>
    %4 = tpu.matmul %0, %3, %cst {dimension_numbers = #tpu.dot_dimension_numbers<[1], [0], [0], [1], [0, 0, 1, 1], [], []>} : vector<8x4xf32>, vector<4x256xf32>, vector<8x256xf32> -> vector<8x256xf32>
    %5 = vector.broadcast %1 : vector<8x1xf32> to vector<8x256xf32>
    %6 = arith.addf %4, %5 : vector<8x256xf32>
    %c0_6 = arith.constant 0 : index
    %c0_7 = arith.constant 0 : index
    %c0_8 = arith.constant 0 : index
    %7 = vector.load %arg5[%c0_6, %c0_7, %c0_8] : memref<2x8x256xf32, #tpu.memory_space<vmem>>, vector<1x8x256xf32>
    %8 = vector.shape_cast %7 : vector<1x8x256xf32> to vector<8x256xf32>
    %9 = vector.shape_cast %6 : vector<8x256xf32> to vector<1x8x256xf32>
    tpu.vector_store %arg5[%c0_6, %c0_7, %c0_8], %9 {strides = array<i32>} : memref<2x8x256xf32, #tpu.memory_space<vmem>>, vector<1x8x256xf32>,
    %c1 = arith.constant 1 : index
    %c0_9 = arith.constant 0 : index
    %c0_10 = arith.constant 0 : index
    %10 = vector.load %arg2[%c1, %c0_9, %c0_10] : memref<2x4x256xf32, #tpu.memory_space<vmem>>, vector<1x4x256xf32>
    %11 = vector.shape_cast %10 : vector<1x4x256xf32> to vector<4x256xf32>
    %cst_11 = arith.constant dense<0.000000e+00> : vector<8x256xf32>
    %12 = tpu.matmul %0, %11, %cst_11 {dimension_numbers = #tpu.dot_dimension_numbers<[1], [0], [0], [1], [0, 0, 1, 1], [], []>} : vector<8x4xf32>, vector<4x256xf32>, vector<8x256xf32> -> vector<8x256xf32>
    %13 = vector.broadcast %1 : vector<8x1xf32> to vector<8x256xf32>
    %14 = arith.addf %12, %13 : vector<8x256xf32>
    %c1_12 = arith.constant 1 : index
    %c0_13 = arith.constant 0 : index
    %c0_14 = arith.constant 0 : index
    %15 = vector.load %arg5[%c1_12, %c0_13, %c0_14] : memref<2x8x256xf32, #tpu.memory_space<vmem>>, vector<1x8x256xf32>
    %16 = vector.shape_cast %15 : vector<1x8x256xf32> to vector<8x256xf32>
    %17 = vector.shape_cast %14 : vector<8x256xf32> to vector<1x8x256xf32>
    tpu.vector_store %arg5[%c1_12, %c0_13, %c0_14], %17 {strides = array<i32>} : memref<2x8x256xf32, #tpu.memory_space<vmem>>, vector<1x8x256xf32>,
    return
  }
  func.func @transform_0(%arg0: i32, %arg1: i32) -> (i32, i32, i32) {
    %c0_i32 = arith.constant 0 : i32
    %c0_i32_0 = arith.constant 0 : i32
    return %arg0, %c0_i32, %arg1 : i32, i32, i32
  }
  func.func @transform_1(%arg0: i32, %arg1: i32) -> (i32, i32) {
    %c0_i32 = arith.constant 0 : i32
    %c0_i32_0 = arith.constant 0 : i32
    %c0_i32_1 = arith.constant 0 : i32
    return %c0_i32, %c0_i32_0 : i32, i32
  }
  func.func @transform_2(%arg0: i32, %arg1: i32) -> (i32, i32) {
    %c0_i32 = arith.constant 0 : i32
    %c0_i32_0 = arith.constant 0 : i32
    %c0_i32_1 = arith.constant 0 : i32
    return %c0_i32, %c0_i32_0 : i32, i32
  }
  func.func @transform_3(%arg0: i32, %arg1: i32) -> (i32, i32, i32) {
    %c0_i32 = arith.constant 0 : i32
    %c0_i32_0 = arith.constant 0 : i32
    return %arg0, %c0_i32, %arg1 : i32, i32, i32
  }
}

</mosaic_0001>

<llo_original>
// kernel: tpu_custom_call.1
$region0: #{tpu_custom_call.1}
  #allocation0 [shape = 'u32[]', space=smem, size = 0x4, offset = 0x4, fixed_abs, tag = 'smem constant byte address 0x4 - core index']
  #allocation1 [shape = 'u32[72,128]{1,0:T(1,128)}', space=vmem, size = 0x9000, scoped, tag = 'internal scratch']
  %s0 = inlined_call_operand.vmem [shape: f32[2,4,256], index: 0, kind: input, shape index: {}]
  %s1 = inlined_call_operand.vmem [shape: f32[8,4], index: 1, kind: input, shape index: {}]
  %s2 = inlined_call_operand.vmem [shape: f32[8,1], index: 2, kind: input, shape index: {}]
  %s3 = inlined_call_operand.hbm [shape: f32[2,8,256], index: 3, kind: output, shape index: {}]
  %s4 = sld [smem:[#allocation0]]
  $region22: #{tpu_custom_call.1} parent=0
    _
  %s6 = ssub.s32 1, %s4
  %s7 = scalar_select 0, %s6, %s4
  $region1: #{tpu_custom_call.1} parent=0
    #allocation2 [shape = 'u8[16384]{0}', space=vmem, size = 0x4000, scoped, tag = 'output window, operand 0, single buffered']
    #allocation3 [shape = 's32[1]{0}', space=sflag, size = 0x4, scoped, tag = 'scoped memory for tpu_custom_call.1']
    %8 = vsyncpa [#allocation3], 0
    // Predicated region
    $region2: #{tpu_custom_call.1} parent=1 // pred_check
      _
    $region3: #{tpu_custom_call.1} parent=1 // pred_check_branch
      %10 = sbr.rel (0) target = $region5
    $region4: #{tpu_custom_call.1} parent=1 // pred_region
      _
    $region5: #{tpu_custom_call.1} parent=1 // pred_fallthru
      _
    // Predicated region
    $region6: #{tpu_custom_call.1} parent=1 // pred_check
      _
    $region7: #{tpu_custom_call.1} parent=1 // pred_check_branch
      %12 = sbr.rel (0) target = $region9
    $region8: #{tpu_custom_call.1} parent=1 // pred_region
      _
    $region9: #{tpu_custom_call.1} parent=1 // pred_fallthru
      _
    // Predicated region
    $region10: #{tpu_custom_call.1} parent=1 // pred_check
      _
    $region11: #{tpu_custom_call.1} parent=1 // pred_check_branch
      %14 = sbr.rel (0) target = $region13
    $region12: #{tpu_custom_call.1} parent=1 // pred_region
      _
    $region13: #{tpu_custom_call.1} parent=1 // pred_fallthru
      _
    %v15 = vld [vmem:[%s1] sm:$0xff]
    %v16 = vld [vmem:[%s2] sm:$0xff]
    %v17 = vld [vmem:[%s0] sm:$0xff]
    %19 = vset.pattern.permute.xlu0 0
    %20 = vperm.xlu0 %19, %v16
    %v21 = vpop.permute.xlu0 %20
    %24 = vst [vmem:[#allocation1] ss:$2 sm:$0xff] %v17
    %v25 = vld.sshfl [vmem:[#allocation1] sm:$0xff pattern:$0x75316420]
    %v26 = vld.sshfl [vmem:[#allocation1 + $0x8] sm:$0xff pattern:$0x75316420]
    %vm27 = vcmask 31744
    %v29 = vsel %vm27, %v15, 0
    %vm31 = vcmask 1043456
    %v32 = vsel %vm31, %v25, 0
    %v34 = vsel %vm31, %v26, 0
    %36 = vmatpush.msra.mxu0 0.0
    %37 = vmatpush.msra.mxu0 0.0
    %38 = vmatpush.msra.mxu0 0.0
    %39 = vmatpush.msra.mxu0 0.0
    %40 = vmatpush.msra.mxu0 0.0
    %41 = vmatpush.msra.mxu0 0.0
    %42 = vmatpush.msra.mxu0 0.0
    %43 = vmatpush.msra.mxu0 0.0
    %44 = vmatpush.msra.mxu0 0.0
    %45 = vmatpush.msra.mxu0 0.0
    %46 = vmatpush.msra.mxu0 0.0
    %47 = vmatpush.msra.mxu0 0.0
    %48 = vmatpush.msra.mxu0 0.0
    %49 = vmatpush.msra.mxu0 0.0
    %50 = vmatpush.msra.mxu0 0.0
    %51 = vmatpush.msra.mxu0 %v32
    %52 = vmatmul.f32.gmra.mxu0 %v29
    %v53 = vpop.f32.mrf.mxu0
    %v54 = vadd.f32 %v21, %v53
    %55 = vdwg.mxu0
    %56 = vmatpush.msra.mxu0 0.0
    %57 = vmatpush.msra.mxu0 0.0
    %58 = vmatpush.msra.mxu0 0.0
    %59 = vmatpush.msra.mxu0 0.0
    %60 = vmatpush.msra.mxu0 0.0
    %61 = vmatpush.msra.mxu0 0.0
    %62 = vmatpush.msra.mxu0 0.0
    %63 = vmatpush.msra.mxu0 0.0
    %64 = vmatpush.msra.mxu0 0.0
    %65 = vmatpush.msra.mxu0 0.0
    %66 = vmatpush.msra.mxu0 0.0
    %67 = vmatpush.msra.mxu0 0.0
    %68 = vmatpush.msra.mxu0 0.0
    %69 = vmatpush.msra.mxu0 0.0
    %70 = vmatpush.msra.mxu0 0.0
    %71 = vmatpush.msra.mxu0 %v34
    %72 = vmatmul.f32.gmra.mxu0 %v29
    %v73 = vpop.f32.mrf.mxu0
    %v74 = vadd.f32 %v21, %v73
    %75 = vdwg.mxu0
    %76 = vst [vmem:[#allocation2] sm:$0xff] %v54
    %77 = vst [vmem:[#allocation2 + $0x8] sm:$0xff] %v74
    %s78 = scalar_lea.vmem %s0, 8
    %v79 = vld [vmem:[%s78] sm:$0xff]
    %81 = vst [vmem:[#allocation1] ss:$2 sm:$0xff] %v79
    %v82 = vld.sshfl [vmem:[#allocation1] sm:$0xff pattern:$0x75316420]
    %v83 = vld.sshfl [vmem:[#allocation1 + $0x8] sm:$0xff pattern:$0x75316420]
    %v84 = vsel %vm31, %v82, 0
    %v86 = vsel %vm31, %v83, 0
    %88 = vmatpush.msra.mxu0 0.0
    %89 = vmatpush.msra.mxu0 0.0
    %90 = vmatpush.msra.mxu0 0.0
    %91 = vmatpush.msra.mxu0 0.0
    %92 = vmatpush.msra.mxu0 0.0
    %93 = vmatpush.msra.mxu0 0.0
    %94 = vmatpush.msra.mxu0 0.0
    %95 = vmatpush.msra.mxu0 0.0
    %96 = vmatpush.msra.mxu0 0.0
    %97 = vmatpush.msra.mxu0 0.0
    %98 = vmatpush.msra.mxu0 0.0
    %99 = vmatpush.msra.mxu0 0.0
    %100 = vmatpush.msra.mxu0 0.0
    %101 = vmatpush.msra.mxu0 0.0
    %102 = vmatpush.msra.mxu0 0.0
    %103 = vmatpush.msra.mxu0 %v84
    %104 = vmatmul.f32.gmra.mxu0 %v29
    %v105 = vpop.f32.mrf.mxu0
    %v106 = vadd.f32 %v21, %v105
    %107 = vdwg.mxu0
    %108 = vmatpush.msra.mxu0 0.0
    %109 = vmatpush.msra.mxu0 0.0
    %110 = vmatpush.msra.mxu0 0.0
    %111 = vmatpush.msra.mxu0 0.0
    %112 = vmatpush.msra.mxu0 0.0
    %113 = vmatpush.msra.mxu0 0.0
    %114 = vmatpush.msra.mxu0 0.0
    %115 = vmatpush.msra.mxu0 0.0
    %116 = vmatpush.msra.mxu0 0.0
    %117 = vmatpush.msra.mxu0 0.0
    %118 = vmatpush.msra.mxu0 0.0
    %119 = vmatpush.msra.mxu0 0.0
    %120 = vmatpush.msra.mxu0 0.0
    %121 = vmatpush.msra.mxu0 0.0
    %122 = vmatpush.msra.mxu0 0.0
    %123 = vmatpush.msra.mxu0 %v86
    %124 = vmatmul.f32.gmra.mxu0 %v29
    %v125 = vpop.f32.mrf.mxu0
    %v126 = vadd.f32 %v21, %v125
    %127 = vdwg.mxu0
    %s128 = scalar_lea.vmem [#allocation2], 16
    %129 = vst [vmem:[%s128] sm:$0xff] %v106
    %130 = vst [vmem:[%s128 + $0x8] sm:$0xff] %v126
    // Predicated region
    $region14: #{tpu_custom_call.1} parent=1 // pred_check
      _
    $region15: #{tpu_custom_call.1} parent=1 // pred_check_branch
      %132 = sbr.rel (0) target = $region17
    $region16: #{tpu_custom_call.1} parent=1 // pred_region
      %134 = vsyncadd [#allocation3], 0
      %s135 = sshll.u32 [#allocation2], 4
      %s136 = int_to_ptr.vmem [resolvable:$true] %s135
      %s137 = sshll.u32 %s3, 4
      %s138 = int_to_ptr.hbm [resolvable:$true] %s137
      %143 = dma.vmem_to_hbm [thread:$0]  %s136, 512, %s138, [#allocation3], 256, 256, 16
    $region17: #{tpu_custom_call.1} parent=1 // pred_fallthru
      _
    // Predicated region
    $region18: #{tpu_custom_call.1} parent=1 // pred_check
      _
    $region19: #{tpu_custom_call.1} parent=1 // pred_check_branch
      %145 = sbr.rel (0) target = $region21
    $region20: #{tpu_custom_call.1} parent=1 // pred_region
      %147 = dma.done [#allocation3], 512
    $region21: #{tpu_custom_call.1} parent=1 // pred_fallthru
      _
    %148 = vsyncpa [#allocation3], 1

</llo_original>
